<compile_context>
chip_gen: v6e
topology: v6e:2x2x1
jax: 0.10.0
libtpu: 0.0.40
codegen_flags: <defaults>
</compile_context>

<pallas_src>
import math

import jax
import jax.numpy as jnp
from jax.experimental import pallas as pl
from jax.experimental.pallas import tpu as pltpu

BN_EPS = 1e-5
N, CIN, COUT, H, W_IMG, KSIZE = 2, 4, 16, 16, 16, 3


def _round_up(v, m):
    return ((v + m - 1) // m) * m


def _make_edge_mask_slab(n, cin_p, h, wdt, kh, kw):
    """(kh*kw*cin_p, n*h*w) f32: row t*cin_p+c holds tap-t's in-bounds mask (batch on lanes)."""
    hw = h * wdt
    p = jnp.arange(n * hw, dtype=jnp.int32)
    sp = p % hw
    row = sp // wdt
    col = sp % wdt
    taps = []
    for ky in range(kh):
        for kx in range(kw):
            dy, dx = ky - kh // 2, kx - kw // 2
            ok = ((row + dy >= 0) & (row + dy < h) &
                  (col + dx >= 0) & (col + dx < wdt))
            taps.append(ok.astype(jnp.float32))
    m = jnp.stack(taps, axis=0)                      # (kh*kw, n*hw)
    return jnp.repeat(m, cin_p, axis=0)              # (kh*kw*cin_p, n*hw)


def _make_tap_weight(w_oihw, cin_p):
    """(cout, kh*kw*cin_p): column t*cin_p + c  ->  W[o, c, ky, kx] (zero for padded c)."""
    cout, cin, kh, kw = w_oihw.shape
    w_pad = jnp.pad(w_oihw.astype(jnp.float32),
                    ((0, 0), (0, cin_p - cin), (0, 0), (0, 0)))
    return jnp.transpose(w_pad, (0, 2, 3, 1)).reshape(cout, kh * kw * cin_p)


def convbr_pallas(x_nchw, w_oihw, gamma, beta):
    n, cin, h, wdt = x_nchw.shape
    cout, _, kh, kw = w_oihw.shape
    hw = h * wdt
    nhw = n * hw
    taps = kh * kw
    cin_p = _round_up(cin, 8)          # sublane-align the tap blocks

    # Batch on the lane axis: lane index = b*HW + y*W + x (lane-dense output).
    x_pad = jnp.pad(x_nchw.astype(jnp.float32), ((0, 0), (0, cin_p - cin), (0, 0), (0, 0)))
    x2 = jnp.transpose(x_pad, (1, 0, 2, 3)).reshape(cin_p, nhw)
    w2 = _make_tap_weight(w_oihw, cin_p)                       # (cout, taps*cin_p)
    mask = _make_edge_mask_slab(n, cin_p, h, wdt, kh, kw)      # (taps*cin_p, nhw)
    ones = jnp.ones((nhw, 8), jnp.float32)                     # MXU row-sum columns
    gamma2 = gamma.reshape(cout, 1).astype(jnp.float32)
    beta2 = beta.reshape(cout, 1).astype(jnp.float32)

    inv_cnt = 1.0 / float(nhw)
    k0 = math.sqrt(2.0 / math.pi)

    def kernel(x_ref, w_ref, mask_ref, ones_ref, gamma_ref, beta_ref, o_ref, tap_ref):
        f32 = jnp.float32
        x = x_ref[...]                                         # (cin_p, nhw)

        # ---- 3x3 "same" conv: per-tap lane rolls (XLU) written into an aligned VMEM
        #      tap slab; edge/batch wrap handled by ONE matched-shape mask multiply;
        #      all taps contracted in ONE MXU matmul.
        for ky in range(kh):
            for kx in range(kw):
                t = ky * kw + kx
                dy, dx = ky - kh // 2, kx - kw // 2
                if dy == 0 and dx == 0:
                    tap_ref[t * cin_p:(t + 1) * cin_p, :] = x          # center tap
                else:
                    shift = (-(dy * wdt + dx)) % nhw                   # static python int
                    tap_ref[t * cin_p:(t + 1) * cin_p, :] = pltpu.roll(x, shift=shift, axis=1)
        stacked = tap_ref[...] * mask_ref[...]                 # (taps*cin_p, nhw)
        conv = jnp.dot(w_ref[...], stacked,
                       preferred_element_type=f32)             # (cout, nhw)

        # ---- BatchNorm2d forward (training-mode batch stats, biased variance).
        #      Row sums via one MXU mat-vec against the ones slab (keeps the XLU free).
        conv_sq = conv * conv
        sums = jnp.dot(jnp.concatenate([conv, conv_sq], axis=0), ones_ref[...],
                       preferred_element_type=f32)             # (2*cout, 8)
        mean = sums[0:cout, 0:1] * inv_cnt                     # (cout, 1)
        var = sums[cout:2 * cout, 0:1] * inv_cnt - mean * mean
        inv_std = jax.lax.rsqrt(var + BN_EPS)                  # EUP, no divides
        scale = gamma_ref[...] * inv_std                       # (cout, 1)
        shift_c = beta_ref[...] - mean * scale
        y = conv * scale + shift_c                             # lane broadcast

        # ---- GELU (tanh form).
        o_ref[...] = 0.5 * y * (1.0 + jnp.tanh(k0 * (y + 0.044715 * y * y * y)))

    vmem_specs = [pl.BlockSpec(memory_space=pltpu.MemorySpace.VMEM) for _ in range(6)]
    out = pl.pallas_call(
        kernel,
        out_shape=jax.ShapeDtypeStruct((cout, nhw), jnp.float32),
        in_specs=vmem_specs,
        out_specs=pl.BlockSpec(memory_space=pltpu.MemorySpace.VMEM),
        scratch_shapes=[pltpu.VMEM((taps * cin_p, nhw), jnp.float32)],
    )(x2, w2, mask, ones, gamma2, beta2)
    return jnp.transpose(out.reshape(cout, n, h, wdt), (1, 0, 2, 3))


# ------------------ pure-JAX reference (mirrors the PyTorch forward) ------------------
def convbr_ref(x, w_oihw, gamma, beta, eps=BN_EPS):
    conv = jax.lax.conv_general_dilated(
        x.astype(jnp.float32), w_oihw.astype(jnp.float32),
        window_strides=(1, 1), padding=((1, 1), (1, 1)),
        dimension_numbers=("NCHW", "OIHW", "NCHW"),
        precision=jax.lax.Precision.HIGHEST)
    mean = conv.mean(axis=(0, 2, 3), keepdims=True)
    var = jnp.mean((conv - mean) ** 2, axis=(0, 2, 3), keepdims=True)   # biased (train mode)
    y = (conv - mean) / jnp.sqrt(var + eps)
    y = y * gamma.reshape(1, -1, 1, 1) + beta.reshape(1, -1, 1, 1)
    k0 = math.sqrt(2.0 / math.pi)
    return 0.5 * y * (1.0 + jnp.tanh(k0 * (y + 0.044715 * y ** 3)))     # tanh-GELU (as kernel)


if __name__ == "__main__":
    key = jax.random.PRNGKey(0)
    kx, kw_, kg, kb = jax.random.split(key, 4)
    x = jax.random.normal(kx, (N, CIN, H, W_IMG), jnp.float32)          # NCHW
    fan_in = CIN * KSIZE * KSIZE
    # kaiming_normal_(a=1): gain = sqrt(2/(1+1)) = 1, std = 1/sqrt(fan_in)
    w = jax.random.normal(kw_, (COUT, CIN, KSIZE, KSIZE), jnp.float32) / math.sqrt(fan_in)
    gamma = 1.0 + 0.1 * jax.random.normal(kg, (COUT,), jnp.float32)
    beta = 0.1 * jax.random.normal(kb, (COUT,), jnp.float32)

    out = jax.block_until_ready(convbr_pallas(x, w, gamma, beta))
    ref = convbr_ref(x, w, gamma, beta)
    assert out.shape == (N, COUT, H, W_IMG)
    assert bool(jnp.allclose(out, ref, atol=2e-3, rtol=2e-3))

    print("KERNEL_OK")
</pallas_src>

<mosaic_0001>
module attributes {stable_mosaic.version = 11 : i64} {
  func.func @kernel(%arg0: memref<8x512xf32, #tpu.memory_space<vmem>>, %arg1: memref<16x72xf32, #tpu.memory_space<vmem>>, %arg2: memref<72x512xf32, #tpu.memory_space<vmem>>, %arg3: memref<512x8xf32, #tpu.memory_space<vmem>>, %arg4: memref<16x1xf32, #tpu.memory_space<vmem>>, %arg5: memref<16x1xf32, #tpu.memory_space<vmem>>, %arg6: memref<16x512xf32, #tpu.memory_space<vmem>>, %arg7: memref<72x512xf32, #tpu.memory_space<vmem>>) attributes {dimension_semantics = [], scalar_prefetch = 0 : i64, scratch_operands = 1 : i64, tpu.core_type = #tpu.core_type<tc>} {
    %c0 = arith.constant 0 : index
    %c0_0 = arith.constant 0 : index
    %0 = vector.load %arg0[%c0, %c0_0] : memref<8x512xf32, #tpu.memory_space<vmem>>, vector<8x512xf32>
    %c17_i32 = arith.constant 17 : i32
    %1 = tpu.dynamic_rotate %0 by %c17_i32 dim 1 : vector<8x512xf32>, i32 -> vector<8x512xf32>
    %c0_1 = arith.constant 0 : index
    %c0_2 = arith.constant 0 : index
    %2 = vector.load %arg7[%c0_1, %c0_2] : memref<72x512xf32, #tpu.memory_space<vmem>>, vector<8x512xf32>
    tpu.vector_store %arg7[%c0_1, %c0_2], %1 {strides = array<i32>} : memref<72x512xf32, #tpu.memory_space<vmem>>, vector<8x512xf32>,
    %c16_i32 = arith.constant 16 : i32
    %3 = tpu.dynamic_rotate %0 by %c16_i32 dim 1 : vector<8x512xf32>, i32 -> vector<8x512xf32>
    %c8 = arith.constant 8 : index
    %c0_3 = arith.constant 0 : index
    %4 = vector.load %arg7[%c8, %c0_3] : memref<72x512xf32, #tpu.memory_space<vmem>>, vector<8x512xf32>
    tpu.vector_store %arg7[%c8, %c0_3], %3 {strides = array<i32>} : memref<72x512xf32, #tpu.memory_space<vmem>>, vector<8x512xf32>,
    %c15_i32 = arith.constant 15 : i32
    %5 = tpu.dynamic_rotate %0 by %c15_i32 dim 1 : vector<8x512xf32>, i32 -> vector<8x512xf32>
    %c16 = arith.constant 16 : index
    %c0_4 = arith.constant 0 : index
    %6 = vector.load %arg7[%c16, %c0_4] : memref<72x512xf32, #tpu.memory_space<vmem>>, vector<8x512xf32>
    tpu.vector_store %arg7[%c16, %c0_4], %5 {strides = array<i32>} : memref<72x512xf32, #tpu.memory_space<vmem>>, vector<8x512xf32>,
    %c1_i32 = arith.constant 1 : i32
    %7 = tpu.dynamic_rotate %0 by %c1_i32 dim 1 : vector<8x512xf32>, i32 -> vector<8x512xf32>
    %c24 = arith.constant 24 : index
    %c0_5 = arith.constant 0 : index
    %8 = vector.load %arg7[%c24, %c0_5] : memref<72x512xf32, #tpu.memory_space<vmem>>, vector<8x512xf32>
    tpu.vector_store %arg7[%c24, %c0_5], %7 {strides = array<i32>} : memref<72x512xf32, #tpu.memory_space<vmem>>, vector<8x512xf32>,
    %c32 = arith.constant 32 : index
    %c0_6 = arith.constant 0 : index
    %9 = vector.load %arg7[%c32, %c0_6] : memref<72x512xf32, #tpu.memory_space<vmem>>, vector<8x512xf32>
    tpu.vector_store %arg7[%c32, %c0_6], %0 {strides = array<i32>} : memref<72x512xf32, #tpu.memory_space<vmem>>, vector<8x512xf32>,
    %c511_i32 = arith.constant 511 : i32
    %10 = tpu.dynamic_rotate %0 by %c511_i32 dim 1 : vector<8x512xf32>, i32 -> vector<8x512xf32>
    %c40 = arith.constant 40 : index
    %c0_7 = arith.constant 0 : index
    %11 = vector.load %arg7[%c40, %c0_7] : memref<72x512xf32, #tpu.memory_space<vmem>>, vector<8x512xf32>
    tpu.vector_store %arg7[%c40, %c0_7], %10 {strides = array<i32>} : memref<72x512xf32, #tpu.memory_space<vmem>>, vector<8x512xf32>,
    %c497_i32 = arith.constant 497 : i32
    %12 = tpu.dynamic_rotate %0 by %c497_i32 dim 1 : vector<8x512xf32>, i32 -> vector<8x512xf32>
    %c48 = arith.constant 48 : index
    %c0_8 = arith.constant 0 : index
    %13 = vector.load %arg7[%c48, %c0_8] : memref<72x512xf32, #tpu.memory_space<vmem>>, vector<8x512xf32>
    tpu.vector_store %arg7[%c48, %c0_8], %12 {strides = array<i32>} : memref<72x512xf32, #tpu.memory_space<vmem>>, vector<8x512xf32>,
    %c496_i32 = arith.constant 496 : i32
    %14 = tpu.dynamic_rotate %0 by %c496_i32 dim 1 : vector<8x512xf32>, i32 -> vector<8x512xf32>
    %c56 = arith.constant 56 : index
    %c0_9 = arith.constant 0 : index
    %15 = vector.load %arg7[%c56, %c0_9] : memref<72x512xf32, #tpu.memory_space<vmem>>, vector<8x512xf32>
    tpu.vector_store %arg7[%c56, %c0_9], %14 {strides = array<i32>} : memref<72x512xf32, #tpu.memory_space<vmem>>, vector<8x512xf32>,
    %c495_i32 = arith.constant 495 : i32
    %16 = tpu.dynamic_rotate %0 by %c495_i32 dim 1 : vector<8x512xf32>, i32 -> vector<8x512xf32>
    %c64 = arith.constant 64 : index
    %c0_10 = arith.constant 0 : index
    %17 = vector.load %arg7[%c64, %c0_10] : memref<72x512xf32, #tpu.memory_space<vmem>>, vector<8x512xf32>
    tpu.vector_store %arg7[%c64, %c0_10], %16 {strides = array<i32>} : memref<72x512xf32, #tpu.memory_space<vmem>>, vector<8x512xf32>,
    %c0_11 = arith.constant 0 : index
    %c0_12 = arith.constant 0 : index
    %18 = vector.load %arg7[%c0_11, %c0_12] : memref<72x512xf32, #tpu.memory_space<vmem>>, vector<72x512xf32>
    %c0_13 = arith.constant 0 : index
    %c0_14 = arith.constant 0 : index
    %19 = vector.load %arg2[%c0_13, %c0_14] : memref<72x512xf32, #tpu.memory_space<vmem>>, vector<72x512xf32>
    %20 = arith.mulf %18, %19 : vector<72x512xf32>
    %c0_15 = arith.constant 0 : index
    %c0_16 = arith.constant 0 : index
    %21 = vector.load %arg1[%c0_15, %c0_16] : memref<16x72xf32, #tpu.memory_space<vmem>>, vector<16x72xf32>
    %cst = arith.constant dense<0.000000e+00> : vector<16x512xf32>
    %22 = tpu.matmul %21, %20, %cst {dimension_numbers = #tpu.dot_dimension_numbers<[1], [0], [0], [1], [0, 0, 1, 1], [], []>} : vector<16x72xf32>, vector<72x512xf32>, vector<16x512xf32> -> vector<16x512xf32>
    %23 = arith.mulf %22, %22 : vector<16x512xf32>
    %24 = tpu.concatenate %22, %23 in 0 : vector<16x512xf32>, vector<16x512xf32> -> vector<32x512xf32>
    %c0_17 = arith.constant 0 : index
    %c0_18 = arith.constant 0 : index
    %25 = vector.load %arg3[%c0_17, %c0_18] : memref<512x8xf32, #tpu.memory_space<vmem>>, vector<512x8xf32>
    %cst_19 = arith.constant dense<0.000000e+00> : vector<32x8xf32>
    %26 = tpu.matmul %24, %25, %cst_19 {dimension_numbers = #tpu.dot_dimension_numbers<[1], [0], [0], [1], [0, 0, 1, 1], [], []>} : vector<32x512xf32>, vector<512x8xf32>, vector<32x8xf32> -> vector<32x8xf32>
    %27 = vector.extract_strided_slice %26 {offsets = [0, 0], sizes = [16, 1], strides = [1, 1]} : vector<32x8xf32> to vector<16x1xf32>
    %cst_20 = arith.constant 0.001953125 : f32
    %28 = vector.broadcast %cst_20 : f32 to vector<16x1xf32>
    %29 = arith.mulf %27, %28 : vector<16x1xf32>
    %30 = vector.extract_strided_slice %26 {offsets = [16, 0], sizes = [16, 1], strides = [1, 1]} : vector<32x8xf32> to vector<16x1xf32>
    %cst_21 = arith.constant 0.001953125 : f32
    %31 = vector.broadcast %cst_21 : f32 to vector<16x1xf32>
    %32 = arith.mulf %30, %31 : vector<16x1xf32>
    %33 = arith.mulf %29, %29 : vector<16x1xf32>
    %34 = arith.subf %32, %33 : vector<16x1xf32>
    %cst_22 = arith.constant 9.99999974E-6 : f32
    %35 = vector.broadcast %cst_22 : f32 to vector<16x1xf32>
    %36 = arith.addf %34, %35 : vector<16x1xf32>
    %37 = math.rsqrt %36 : vector<16x1xf32>
    %c0_23 = arith.constant 0 : index
    %c0_24 = arith.constant 0 : index
    %38 = vector.load %arg4[%c0_23, %c0_24] : memref<16x1xf32, #tpu.memory_space<vmem>>, vector<16x1xf32>
    %39 = arith.mulf %38, %37 : vector<16x1xf32>
    %c0_25 = arith.constant 0 : index
    %c0_26 = arith.constant 0 : index
    %40 = vector.load %arg5[%c0_25, %c0_26] : memref<16x1xf32, #tpu.memory_space<vmem>>, vector<16x1xf32>
    %41 = arith.mulf %29, %39 : vector<16x1xf32>
    %42 = arith.subf %40, %41 : vector<16x1xf32>
    %43 = vector.broadcast %39 : vector<16x1xf32> to vector<16x512xf32>
    %44 = arith.mulf %22, %43 : vector<16x512xf32>
    %45 = vector.broadcast %42 : vector<16x1xf32> to vector<16x512xf32>
    %46 = arith.addf %44, %45 : vector<16x512xf32>
    %cst_27 = arith.constant 5.000000e-01 : f32
    %47 = vector.broadcast %cst_27 : f32 to vector<16x512xf32>
    %48 = arith.mulf %47, %46 : vector<16x512xf32>
    %cst_28 = arith.constant 4.471500e-02 : f32
    %49 = vector.broadcast %cst_28 : f32 to vector<16x512xf32>
    %50 = arith.mulf %49, %46 : vector<16x512xf32>
    %51 = arith.mulf %50, %46 : vector<16x512xf32>
    %52 = arith.mulf %51, %46 : vector<16x512xf32>
    %53 = arith.addf %46, %52 : vector<16x512xf32>
    %cst_29 = arith.constant 0.797884583 : f32
    %54 = vector.broadcast %cst_29 : f32 to vector<16x512xf32>
    %55 = arith.mulf %54, %53 : vector<16x512xf32>
    %56 = math.tanh %55 : vector<16x512xf32>
    %cst_30 = arith.constant 1.000000e+00 : f32
    %57 = vector.broadcast %cst_30 : f32 to vector<16x512xf32>
    %58 = arith.addf %57, %56 : vector<16x512xf32>
    %59 = arith.mulf %48, %58 : vector<16x512xf32>
    %c0_31 = arith.constant 0 : index
    %c0_32 = arith.constant 0 : index
    %60 = vector.load %arg6[%c0_31, %c0_32] : memref<16x512xf32, #tpu.memory_space<vmem>>, vector<16x512xf32>
    tpu.vector_store %arg6[%c0_31, %c0_32], %59 {strides = array<i32>} : memref<16x512xf32, #tpu.memory_space<vmem>>, vector<16x512xf32>,
    return
  }
}

</mosaic_0001>

<llo_original>
// kernel: tpu_custom_call.1
$region0: #{tpu_custom_call.1}
  #allocation0 [shape = 'u32[]', space=smem, size = 0x4, offset = 0x4, fixed_abs, tag = 'smem constant byte address 0x4 - core index']
  #allocation1 [shape = 'u32[144,128]{1,0:T(1,128)}', space=vmem, size = 0x12000, scoped, tag = 'internal scratch']
  #allocation2 [shape = 'f32[72,512]{1,0:T(8,128)}', space=vmem, size = 0x24000, scoped, tag = 'scratch operand']
  %s0 = inlined_call_operand.vmem [shape: f32[8,512], index: 0, kind: input, shape index: {}]
  %s1 = inlined_call_operand.vmem [shape: f32[16,72], index: 1, kind: input, shape index: {}]
  %s2 = inlined_call_operand.vmem [shape: f32[72,512], index: 2, kind: input, shape index: {}]
  %s3 = inlined_call_operand.vmem [shape: f32[512,8], index: 3, kind: input, shape index: {}]
  %s4 = inlined_call_operand.vmem [shape: f32[16,1], index: 4, kind: input, shape index: {}]
  %s5 = inlined_call_operand.vmem [shape: f32[16,1], index: 5, kind: input, shape index: {}]
  %s6 = inlined_call_operand.hbm [shape: f32[16,512], index: 6, kind: output, shape index: {}]
  %s7 = sld [smem:[#allocation0]]
  $region34: #{tpu_custom_call.1} parent=0
    _
  %s9 = ssub.s32 1, %s7
  %s10 = scalar_select 0, %s9, %s7
  $region1: #{tpu_custom_call.1} parent=0
    #allocation3 [shape = 'u8[32768]{0}', space=vmem, size = 0x8000, scoped, tag = 'output window, operand 0, single buffered']
    #allocation4 [shape = 's32[1]{0}', space=sflag, size = 0x4, scoped, tag = 'scoped memory for tpu_custom_call.1']
    %11 = vsyncpa [#allocation4], 0
    // Predicated region
    $region2: #{tpu_custom_call.1} parent=1 // pred_check
      _
    $region3: #{tpu_custom_call.1} parent=1 // pred_check_branch
      %13 = sbr.rel (0) target = $region5
    $region4: #{tpu_custom_call.1} parent=1 // pred_region
      _
    $region5: #{tpu_custom_call.1} parent=1 // pred_fallthru
      _
    // Predicated region
    $region6: #{tpu_custom_call.1} parent=1 // pred_check
      _
    $region7: #{tpu_custom_call.1} parent=1 // pred_check_branch
      %15 = sbr.rel (0) target = $region9
    $region8: #{tpu_custom_call.1} parent=1 // pred_region
      _
    $region9: #{tpu_custom_call.1} parent=1 // pred_fallthru
      _
    // Predicated region
    $region10: #{tpu_custom_call.1} parent=1 // pred_check
      _
    $region11: #{tpu_custom_call.1} parent=1 // pred_check_branch
      %17 = sbr.rel (0) target = $region13
    $region12: #{tpu_custom_call.1} parent=1 // pred_region
      _
    $region13: #{tpu_custom_call.1} parent=1 // pred_fallthru
      _
    // Predicated region
    $region14: #{tpu_custom_call.1} parent=1 // pred_check
      _
    $region15: #{tpu_custom_call.1} parent=1 // pred_check_branch
      %19 = sbr.rel (0) target = $region17
    $region16: #{tpu_custom_call.1} parent=1 // pred_region
      _
    $region17: #{tpu_custom_call.1} parent=1 // pred_fallthru
      _
    // Predicated region
    $region18: #{tpu_custom_call.1} parent=1 // pred_check
      _
    $region19: #{tpu_custom_call.1} parent=1 // pred_check_branch
      %21 = sbr.rel (0) target = $region21
    $region20: #{tpu_custom_call.1} parent=1 // pred_region
      _
    $region21: #{tpu_custom_call.1} parent=1 // pred_fallthru
      _
    // Predicated region
    $region22: #{tpu_custom_call.1} parent=1 // pred_check
      _
    $region23: #{tpu_custom_call.1} parent=1 // pred_check_branch
      %23 = sbr.rel (0) target = $region25
    $region24: #{tpu_custom_call.1} parent=1 // pred_region
      _
    $region25: #{tpu_custom_call.1} parent=1 // pred_fallthru
      _
    %v24 = vld [vmem:[%s0] sm:$0xff]
    %v25 = vld [vmem:[%s0 + $0x8] sm:$0xff]
    %v26 = vld [vmem:[%s0 + $0x10] sm:$0xff]
    %v27 = vld [vmem:[%s0 + $0x18] sm:$0xff]
    %28 = vrot.lane.b32.xlu0 %v24, 17
    %v29 = vpop.permute.xlu0 %28
    %30 = vrot.lane.b32.xlu0 %v25, 17
    %v31 = vpop.permute.xlu0 %30
    %32 = vrot.lane.b32.xlu0 %v26, 17
    %v33 = vpop.permute.xlu0 %32
    %34 = vrot.lane.b32.xlu0 %v27, 17
    %v35 = vpop.permute.xlu0 %34
    %v36 = vlaneseq
    %v37 = vand.u32 %v36, 127
    %vm38 = vcmp.lt.s32.totalorder %v37, 17
    %v39 = vsel %vm38, %v33, %v35
    %v40 = vsel %vm38, %v31, %v33
    %v41 = vsel %vm38, %v29, %v31
    %v42 = vsel %vm38, %v35, %v29
    %43 = vst [vmem:[#allocation2] sm:$0xff] %v42
    %44 = vst [vmem:[#allocation2 + $0x8] sm:$0xff] %v41
    %45 = vst [vmem:[#allocation2 + $0x10] sm:$0xff] %v40
    %46 = vst [vmem:[#allocation2 + $0x18] sm:$0xff] %v39
    %47 = vrot.lane.b32.xlu0 %v24, 16
    %v48 = vpop.permute.xlu0 %47
    %49 = vrot.lane.b32.xlu0 %v25, 16
    %v50 = vpop.permute.xlu0 %49
    %51 = vrot.lane.b32.xlu0 %v26, 16
    %v52 = vpop.permute.xlu0 %51
    %53 = vrot.lane.b32.xlu0 %v27, 16
    %v54 = vpop.permute.xlu0 %53
    %vm55 = vcmp.lt.s32.totalorder %v37, 16
    %v56 = vsel %vm55, %v52, %v54
    %v57 = vsel %vm55, %v50, %v52
    %v58 = vsel %vm55, %v48, %v50
    %v59 = vsel %vm55, %v54, %v48
    %60 = vst [vmem:[#allocation2 + $0x20] sm:$0xff] %v59
    %61 = vst [vmem:[#allocation2 + $0x28] sm:$0xff] %v58
    %62 = vst [vmem:[#allocation2 + $0x30] sm:$0xff] %v57
    %63 = vst [vmem:[#allocation2 + $0x38] sm:$0xff] %v56
    %64 = vrot.lane.b32.xlu0 %v24, 15
    %v65 = vpop.permute.xlu0 %64
    %66 = vrot.lane.b32.xlu0 %v25, 15
    %v67 = vpop.permute.xlu0 %66
    %68 = vrot.lane.b32.xlu0 %v26, 15
    %v69 = vpop.permute.xlu0 %68
    %70 = vrot.lane.b32.xlu0 %v27, 15
    %v71 = vpop.permute.xlu0 %70
    %vm72 = vcmp.lt.s32.totalorder %v37, 15
    %v73 = vsel %vm72, %v69, %v71
    %v74 = vsel %vm72, %v67, %v69
    %v75 = vsel %vm72, %v65, %v67
    %v76 = vsel %vm72, %v71, %v65
    %77 = vst [vmem:[#allocation2 + $0x40] sm:$0xff] %v76
    %78 = vst [vmem:[#allocation2 + $0x48] sm:$0xff] %v75
    %79 = vst [vmem:[#allocation2 + $0x50] sm:$0xff] %v74
    %80 = vst [vmem:[#allocation2 + $0x58] sm:$0xff] %v73
    %81 = vrot.lane.b32.xlu0 %v24, 1
    %v82 = vpop.permute.xlu0 %81
    %83 = vrot.lane.b32.xlu0 %v25, 1
    %v84 = vpop.permute.xlu0 %83
    %85 = vrot.lane.b32.xlu0 %v26, 1
    %v86 = vpop.permute.xlu0 %85
    %87 = vrot.lane.b32.xlu0 %v27, 1
    %v88 = vpop.permute.xlu0 %87
    %vm89 = vcmp.lt.s32.totalorder %v37, 1
    %v90 = vsel %vm89, %v86, %v88
    %v91 = vsel %vm89, %v84, %v86
    %v92 = vsel %vm89, %v82, %v84
    %v93 = vsel %vm89, %v88, %v82
    %94 = vst [vmem:[#allocation2 + $0x60] sm:$0xff] %v93
    %95 = vst [vmem:[#allocation2 + $0x68] sm:$0xff] %v92
    %96 = vst [vmem:[#allocation2 + $0x70] sm:$0xff] %v91
    %97 = vst [vmem:[#allocation2 + $0x78] sm:$0xff] %v90
    %98 = vst [vmem:[#allocation2 + $0x80] sm:$0xff] %v24
    %99 = vst [vmem:[#allocation2 + $0x88] sm:$0xff] %v25
    %100 = vst [vmem:[#allocation2 + $0x90] sm:$0xff] %v26
    %101 = vst [vmem:[#allocation2 + $0x98] sm:$0xff] %v27
    %102 = vrot.lane.b32.xlu0 %v24, 127
    %v103 = vpop.permute.xlu0 %102
    %104 = vrot.lane.b32.xlu0 %v25, 127
    %v105 = vpop.permute.xlu0 %104
    %106 = vrot.lane.b32.xlu0 %v26, 127
    %v107 = vpop.permute.xlu0 %106
    %108 = vrot.lane.b32.xlu0 %v27, 127
    %v109 = vpop.permute.xlu0 %108
    %vm110 = vcmp.lt.s32.totalorder %v37, 127
    %v111 = vsel %vm110, %v107, %v109
    %v112 = vsel %vm110, %v105, %v107
    %v113 = vsel %vm110, %v103, %v105
    %v114 = vsel %vm110, %v109, %v103
    %115 = vst [vmem:[#allocation2 + $0xa0] sm:$0xff] %v113
    %116 = vst [vmem:[#allocation2 + $0xa8] sm:$0xff] %v112
    %117 = vst [vmem:[#allocation2 + $0xb0] sm:$0xff] %v111
    %118 = vst [vmem:[#allocation2 + $0xb8] sm:$0xff] %v114
    %119 = vrot.lane.b32.xlu0 %v24, 113
    %v120 = vpop.permute.xlu0 %119
    %121 = vrot.lane.b32.xlu0 %v25, 113
    %v122 = vpop.permute.xlu0 %121
    %123 = vrot.lane.b32.xlu0 %v26, 113
    %v124 = vpop.permute.xlu0 %123
    %125 = vrot.lane.b32.xlu0 %v27, 113
    %v126 = vpop.permute.xlu0 %125
    %vm127 = vcmp.lt.s32.totalorder %v37, 113
    %v128 = vsel %vm127, %v124, %v126
    %v129 = vsel %vm127, %v122, %v124
    %v130 = vsel %vm127, %v120, %v122
    %v131 = vsel %vm127, %v126, %v120
    %132 = vst [vmem:[#allocation2 + $0xc0] sm:$0xff] %v130
    %133 = vst [vmem:[#allocation2 + $0xc8] sm:$0xff] %v129
    %134 = vst [vmem:[#allocation2 + $0xd0] sm:$0xff] %v128
    %135 = vst [vmem:[#allocation2 + $0xd8] sm:$0xff] %v131
    %136 = vrot.lane.b32.xlu0 %v24, 112
    %v137 = vpop.permute.xlu0 %136
    %138 = vrot.lane.b32.xlu0 %v25, 112
    %v139 = vpop.permute.xlu0 %138
    %140 = vrot.lane.b32.xlu0 %v26, 112
    %v141 = vpop.permute.xlu0 %140
    %142 = vrot.lane.b32.xlu0 %v27, 112
    %v143 = vpop.permute.xlu0 %142
    %vm144 = vcmp.lt.s32.totalorder %v37, 112
    %v145 = vsel %vm144, %v141, %v143
    %v146 = vsel %vm144, %v139, %v141
    %v147 = vsel %vm144, %v137, %v139
    %v148 = vsel %vm144, %v143, %v137
    %149 = vst [vmem:[#allocation2 + $0xe0] sm:$0xff] %v147
    %150 = vst [vmem:[#allocation2 + $0xe8] sm:$0xff] %v146
    %151 = vst [vmem:[#allocation2 + $0xf0] sm:$0xff] %v145
    %152 = vst [vmem:[#allocation2 + $0xf8] sm:$0xff] %v148
    %153 = vrot.lane.b32.xlu0 %v24, 111
    %v154 = vpop.permute.xlu0 %153
    %155 = vrot.lane.b32.xlu0 %v25, 111
    %v156 = vpop.permute.xlu0 %155
    %157 = vrot.lane.b32.xlu0 %v26, 111
    %v158 = vpop.permute.xlu0 %157
    %159 = vrot.lane.b32.xlu0 %v27, 111
    %v160 = vpop.permute.xlu0 %159
    %vm161 = vcmp.lt.s32.totalorder %v37, 111
    %v162 = vsel %vm161, %v158, %v160
    %v163 = vsel %vm161, %v156, %v158
    %v164 = vsel %vm161, %v154, %v156
    %v165 = vsel %vm161, %v160, %v154
    %166 = vst [vmem:[#allocation2 + $0x100] sm:$0xff] %v164
    %167 = vst [vmem:[#allocation2 + $0x108] sm:$0xff] %v163
    %168 = vst [vmem:[#allocation2 + $0x110] sm:$0xff] %v162
    %169 = vst [vmem:[#allocation2 + $0x118] sm:$0xff] %v165
    %v170 = vld [vmem:[#allocation2] sm:$0xff]
    %v171 = vld [vmem:[#allocation2 + $0x8] sm:$0xff]
    %v172 = vld [vmem:[#allocation2 + $0x10] sm:$0xff]
    %v173 = vld [vmem:[#allocation2 + $0x18] sm:$0xff]
    %v174 = vld [vmem:[#allocation2 + $0x20] sm:$0xff]
    %v175 = vld [vmem:[#allocation2 + $0x28] sm:$0xff]
    %v176 = vld [vmem:[#allocation2 + $0x30] sm:$0xff]
    %v177 = vld [vmem:[#allocation2 + $0x38] sm:$0xff]
    %v178 = vld [vmem:[#allocation2 + $0x40] sm:$0xff]
    %v179 = vld [vmem:[#allocation2 + $0x48] sm:$0xff]
    %v180 = vld [vmem:[#allocation2 + $0x50] sm:$0xff]
    %v181 = vld [vmem:[#allocation2 + $0x58] sm:$0xff]
    %v182 = vld [vmem:[#allocation2 + $0x60] sm:$0xff]
    %v183 = vld [vmem:[#allocation2 + $0x68] sm:$0xff]
    %v184 = vld [vmem:[#allocation2 + $0x70] sm:$0xff]
    %v185 = vld [vmem:[#allocation2 + $0x78] sm:$0xff]
    %v186 = vld [vmem:[#allocation2 + $0x80] sm:$0xff]
    %v187 = vld [vmem:[#allocation2 + $0x88] sm:$0xff]
    %v188 = vld [vmem:[#allocation2 + $0x90] sm:$0xff]
    %v189 = vld [vmem:[#allocation2 + $0x98] sm:$0xff]
    %v190 = vld [vmem:[#allocation2 + $0xa0] sm:$0xff]
    %v191 = vld [vmem:[#allocation2 + $0xa8] sm:$0xff]
    %v192 = vld [vmem:[#allocation2 + $0xb0] sm:$0xff]
    %v193 = vld [vmem:[#allocation2 + $0xb8] sm:$0xff]
    %v194 = vld [vmem:[#allocation2 + $0xc0] sm:$0xff]
    %v195 = vld [vmem:[#allocation2 + $0xc8] sm:$0xff]
    %v196 = vld [vmem:[#allocation2 + $0xd0] sm:$0xff]
    %v197 = vld [vmem:[#allocation2 + $0xd8] sm:$0xff]
    %v198 = vld [vmem:[#allocation2 + $0xe0] sm:$0xff]
    %v199 = vld [vmem:[#allocation2 + $0xe8] sm:$0xff]
    %v200 = vld [vmem:[#allocation2 + $0xf0] sm:$0xff]
    %v201 = vld [vmem:[#allocation2 + $0xf8] sm:$0xff]
    %v202 = vld [vmem:[#allocation2 + $0x100] sm:$0xff]
    %v203 = vld [vmem:[#allocation2 + $0x108] sm:$0xff]
    %v204 = vld [vmem:[#allocation2 + $0x110] sm:$0xff]
    %v205 = vld [vmem:[#allocation2 + $0x118] sm:$0xff]
    %v206 = vld [vmem:[%s2] sm:$0xff]
    %v207 = vld [vmem:[%s2 + $0x8] sm:$0xff]
    %v208 = vld [vmem:[%s2 + $0x10] sm:$0xff]
    %v209 = vld [vmem:[%s2 + $0x18] sm:$0xff]
    %v210 = vld [vmem:[%s2 + $0x20] sm:$0xff]
    %v211 = vld [vmem:[%s2 + $0x28] sm:$0xff]
    %v212 = vld [vmem:[%s2 + $0x30] sm:$0xff]
    %v213 = vld [vmem:[%s2 + $0x38] sm:$0xff]
    %v214 = vld [vmem:[%s2 + $0x40] sm:$0xff]
    %v215 = vld [vmem:[%s2 + $0x48] sm:$0xff]
    %v216 = vld [vmem:[%s2 + $0x50] sm:$0xff]
    %v217 = vld [vmem:[%s2 + $0x58] sm:$0xff]
    %v218 = vld [vmem:[%s2 + $0x60] sm:$0xff]
    %v219 = vld [vmem:[%s2 + $0x68] sm:$0xff]
    %v220 = vld [vmem:[%s2 + $0x70] sm:$0xff]
    %v221 = vld [vmem:[%s2 + $0x78] sm:$0xff]
    %v222 = vld [vmem:[%s2 + $0x80] sm:$0xff]
    %v223 = vld [vmem:[%s2 + $0x88] sm:$0xff]
    %v224 = vld [vmem:[%s2 + $0x90] sm:$0xff]
    %v225 = vld [vmem:[%s2 + $0x98] sm:$0xff]
    %v226 = vld [vmem:[%s2 + $0xa0] sm:$0xff]
    %v227 = vld [vmem:[%s2 + $0xa8] sm:$0xff]
    %v228 = vld [vmem:[%s2 + $0xb0] sm:$0xff]
    %v229 = vld [vmem:[%s2 + $0xb8] sm:$0xff]
    %v230 = vld [vmem:[%s2 + $0xc0] sm:$0xff]
    %v231 = vld [vmem:[%s2 + $0xc8] sm:$0xff]
    %v232 = vld [vmem:[%s2 + $0xd0] sm:$0xff]
    %v233 = vld [vmem:[%s2 + $0xd8] sm:$0xff]
    %v234 = vld [vmem:[%s2 + $0xe0] sm:$0xff]
    %v235 = vld [vmem:[%s2 + $0xe8] sm:$0xff]
    %v236 = vld [vmem:[%s2 + $0xf0] sm:$0xff]
    %v237 = vld [vmem:[%s2 + $0xf8] sm:$0xff]
    %v238 = vld [vmem:[%s2 + $0x100] sm:$0xff]
    %v239 = vld [vmem:[%s2 + $0x108] sm:$0xff]
    %v240 = vld [vmem:[%s2 + $0x110] sm:$0xff]
    %v241 = vld [vmem:[%s2 + $0x118] sm:$0xff]
    %v242 = vmul.f32 %v170, %v206
    %v243 = vmul.f32 %v171, %v207
    %v244 = vmul.f32 %v172, %v208
    %v245 = vmul.f32 %v173, %v209
    %v246 = vmul.f32 %v174, %v210
    %v247 = vmul.f32 %v175, %v211
    %v248 = vmul.f32 %v176, %v212
    %v249 = vmul.f32 %v177, %v213
    %v250 = vmul.f32 %v178, %v214
    %v251 = vmul.f32 %v179, %v215
    %v252 = vmul.f32 %v180, %v216
    %v253 = vmul.f32 %v181, %v217
    %v254 = vmul.f32 %v182, %v218
    %v255 = vmul.f32 %v183, %v219
    %v256 = vmul.f32 %v184, %v220
    %v257 = vmul.f32 %v185, %v221
    %v258 = vmul.f32 %v186, %v222
    %v259 = vmul.f32 %v187, %v223
    %v260 = vmul.f32 %v188, %v224
    %v261 = vmul.f32 %v189, %v225
    %v262 = vmul.f32 %v190, %v226
    %v263 = vmul.f32 %v191, %v227
    %v264 = vmul.f32 %v192, %v228
    %v265 = vmul.f32 %v193, %v229
    %v266 = vmul.f32 %v194, %v230
    %v267 = vmul.f32 %v195, %v231
    %v268 = vmul.f32 %v196, %v232
    %v269 = vmul.f32 %v197, %v233
    %v270 = vmul.f32 %v198, %v234
    %v271 = vmul.f32 %v199, %v235
    %v272 = vmul.f32 %v200, %v236
    %v273 = vmul.f32 %v201, %v237
    %v274 = vmul.f32 %v202, %v238
    %v275 = vmul.f32 %v203, %v239
    %v276 = vmul.f32 %v204, %v240
    %v277 = vmul.f32 %v205, %v241
    %v278 = vld [vmem:[%s1] sm:$0xff]
    %v279 = vld [vmem:[%s1 + $0x8] sm:$0xff]
    %vm280 = vcmask 588800
    %v282 = vsel %vm280, %v278, 0
    %v285 = vsel %vm280, %v279, 0
    %287 = vmatprep.subr.mxu0 0.0
    %288 = vmatpush1.msra.mxu0 0.0
    %289 = vmatprep.subr.mxu0 0.0
    %290 = vmatpush1.msra.mxu0 0.0
    %291 = vmatprep.subr.mxu0 0.0
    %292 = vmatpush1.msra.mxu0 0.0
    %293 = vmatprep.subr.mxu0 0.0
    %294 = vmatpush1.msra.mxu0 0.0
    %295 = vmatprep.subr.mxu0 0.0
    %296 = vmatpush1.msra.mxu0 0.0
    %297 = vmatprep.subr.mxu0 0.0
    %298 = vmatpush1.msra.mxu0 0.0
    %299 = vmatprep.subr.mxu0 0.0
    %300 = vmatpush1.msra.mxu0 0.0
    %301 = vmatprep.subr.mxu0 %v275
    %302 = vmatpush1.msra.mxu0 %v274
    %303 = vmatprep.subr.mxu0 %v271
    %304 = vmatpush1.msra.mxu0 %v270
    %305 = vmatprep.subr.mxu0 %v267
    %306 = vmatpush1.msra.mxu0 %v266
    %307 = vmatprep.subr.mxu0 %v263
    %308 = vmatpush1.msra.mxu0 %v262
    %309 = vmatprep.subr.mxu0 %v259
    %310 = vmatpush1.msra.mxu0 %v258
    %311 = vmatprep.subr.mxu0 %v255
    %312 = vmatpush1.msra.mxu0 %v254
    %313 = vmatprep.subr.mxu0 %v251
    %314 = vmatpush1.msra.mxu0 %v250
    %315 = vmatprep.subr.mxu0 %v247
    %316 = vmatpush1.msra.mxu0 %v246
    %317 = vmatprep.subr.mxu0 %v243
    %318 = vmatpush1.msra.mxu0 %v242
    %319 = vmatprep.subr.mxu0 0.0
    %320 = vmatpush2.msra.mxu0 0.0
    %321 = vmatprep.subr.mxu0 0.0
    %322 = vmatpush2.msra.mxu0 0.0
    %323 = vmatprep.subr.mxu0 0.0
    %324 = vmatpush2.msra.mxu0 0.0
    %325 = vmatprep.subr.mxu0 0.0
    %326 = vmatpush2.msra.mxu0 0.0
    %327 = vmatprep.subr.mxu0 0.0
    %328 = vmatpush2.msra.mxu0 0.0
    %329 = vmatprep.subr.mxu0 0.0
    %330 = vmatpush2.msra.mxu0 0.0
    %331 = vmatprep.subr.mxu0 0.0
    %332 = vmatpush2.msra.mxu0 0.0
    %333 = vmatprep.subr.mxu0 0.0
    %334 = vmatpush2.msra.mxu0 0.0
    %335 = vmatprep.subr.mxu0 0.0
    %336 = vmatpush2.msra.mxu0 0.0
    %337 = vmatprep.subr.mxu0 0.0
    %338 = vmatpush2.msra.mxu0 0.0
    %339 = vmatprep.subr.mxu0 0.0
    %340 = vmatpush2.msra.mxu0 0.0
    %341 = vmatprep.subr.mxu0 0.0
    %342 = vmatpush2.msra.mxu0 0.0
    %343 = vmatprep.subr.mxu0 0.0
    %344 = vmatpush2.msra.mxu0 0.0
    %345 = vmatprep.subr.mxu0 0.0
    %346 = vmatpush2.msra.mxu0 0.0
    %347 = vmatprep.subr.mxu0 0.0
    %348 = vmatpush2.msra.mxu0 0.0
    %349 = vmatprep.subr.mxu0 0.0
    %350 = vmatpush2.msra.mxu0 0.0
    %351 = vmatprep.mubr.f32.mxu0 0.0
    %352 = vmatmul.mubr.f32.gmra.mxu0 %v282
    %v353 = vpop.f32.mrf.mxu0
    %v354 = vadd.f32 0.0, %v353
    %v355 = vpop.f32.mrf.mxu0
    %v356 = vadd.f32 0.0, %v355
    %357 = vmatprep.mubr.f32.mxu0 0.0
    %358 = vmatmul.mubr.f32.gmra.mxu0 %v285
    %v359 = vpop.f32.mrf.mxu0
    %v360 = vadd.f32 0.0, %v359
    %v361 = vpop.f32.mrf.mxu0
    %v362 = vadd.f32 0.0, %v361
    %363 = vdwg.mxu0
    %364 = vmatprep.subr.mxu0 0.0
    %365 = vmatpush1.msra.mxu0 0.0
    %366 = vmatprep.subr.mxu0 0.0
    %367 = vmatpush1.msra.mxu0 0.0
    %368 = vmatprep.subr.mxu0 0.0
    %369 = vmatpush1.msra.mxu0 0.0
    %370 = vmatprep.subr.mxu0 0.0
    %371 = vmatpush1.msra.mxu0 0.0
    %372 = vmatprep.subr.mxu0 0.0
    %373 = vmatpush1.msra.mxu0 0.0
    %374 = vmatprep.subr.mxu0 0.0
    %375 = vmatpush1.msra.mxu0 0.0
    %376 = vmatprep.subr.mxu0 0.0
    %377 = vmatpush1.msra.mxu0 0.0
    %378 = vmatprep.subr.mxu0 %v277
    %379 = vmatpush1.msra.mxu0 %v276
    %380 = vmatprep.subr.mxu0 %v273
    %381 = vmatpush1.msra.mxu0 %v272
    %382 = vmatprep.subr.mxu0 %v269
    %383 = vmatpush1.msra.mxu0 %v268
    %384 = vmatprep.subr.mxu0 %v265
    %385 = vmatpush1.msra.mxu0 %v264
    %386 = vmatprep.subr.mxu0 %v261
    %387 = vmatpush1.msra.mxu0 %v260
    %388 = vmatprep.subr.mxu0 %v257
    %389 = vmatpush1.msra.mxu0 %v256
    %390 = vmatprep.subr.mxu0 %v253
    %391 = vmatpush1.msra.mxu0 %v252
    %392 = vmatprep.subr.mxu0 %v249
    %393 = vmatpush1.msra.mxu0 %v248
    %394 = vmatprep.subr.mxu0 %v245
    %395 = vmatpush1.msra.mxu0 %v244
    %396 = vmatprep.subr.mxu0 0.0
    %397 = vmatpush2.msra.mxu0 0.0
    %398 = vmatprep.subr.mxu0 0.0
    %399 = vmatpush2.msra.mxu0 0.0
    %400 = vmatprep.subr.mxu0 0.0
    %401 = vmatpush2.msra.mxu0 0.0
    %402 = vmatprep.subr.mxu0 0.0
    %403 = vmatpush2.msra.mxu0 0.0
    %404 = vmatprep.subr.mxu0 0.0
    %405 = vmatpush2.msra.mxu0 0.0
    %406 = vmatprep.subr.mxu0 0.0
    %407 = vmatpush2.msra.mxu0 0.0
    %408 = vmatprep.subr.mxu0 0.0
    %409 = vmatpush2.msra.mxu0 0.0
    %410 = vmatprep.subr.mxu0 0.0
    %411 = vmatpush2.msra.mxu0 0.0
    %412 = vmatprep.subr.mxu0 0.0
    %413 = vmatpush2.msra.mxu0 0.0
    %414 = vmatprep.subr.mxu0 0.0
    %415 = vmatpush2.msra.mxu0 0.0
    %416 = vmatprep.subr.mxu0 0.0
    %417 = vmatpush2.msra.mxu0 0.0
    %418 = vmatprep.subr.mxu0 0.0
    %419 = vmatpush2.msra.mxu0 0.0
    %420 = vmatprep.subr.mxu0 0.0
    %421 = vmatpush2.msra.mxu0 0.0
    %422 = vmatprep.subr.mxu0 0.0
    %423 = vmatpush2.msra.mxu0 0.0
    %424 = vmatprep.subr.mxu0 0.0
    %425 = vmatpush2.msra.mxu0 0.0
    %426 = vmatprep.subr.mxu0 0.0
    %427 = vmatpush2.msra.mxu0 0.0
    %428 = vmatprep.mubr.f32.mxu0 0.0
    %429 = vmatmul.mubr.f32.gmra.mxu0 %v282
    %v430 = vpop.f32.mrf.mxu0
    %v431 = vadd.f32 0.0, %v430
    %v432 = vpop.f32.mrf.mxu0
    %v433 = vadd.f32 0.0, %v432
    %434 = vmatprep.mubr.f32.mxu0 0.0
    %435 = vmatmul.mubr.f32.gmra.mxu0 %v285
    %v436 = vpop.f32.mrf.mxu0
    %v437 = vadd.f32 0.0, %v436
    %v438 = vpop.f32.mrf.mxu0
    %v439 = vadd.f32 0.0, %v438
    %440 = vdwg.mxu0
    %v441 = vmul.f32 %v354, %v354
    %v442 = vmul.f32 %v356, %v356
    %v443 = vmul.f32 %v431, %v431
    %v444 = vmul.f32 %v433, %v433
    %v445 = vmul.f32 %v360, %v360
    %v446 = vmul.f32 %v362, %v362
    %v447 = vmul.f32 %v437, %v437
    %v448 = vmul.f32 %v439, %v439
    %v449 = vld [vmem:[%s3] sm:$0xff]
    %v450 = vld [vmem:[%s3 + $0x8] sm:$0xff]
    %v451 = vld [vmem:[%s3 + $0x10] sm:$0xff]
    %v452 = vld [vmem:[%s3 + $0x18] sm:$0xff]
    %v453 = vld [vmem:[%s3 + $0x20] sm:$0xff]
    %v454 = vld [vmem:[%s3 + $0x28] sm:$0xff]
    %v455 = vld [vmem:[%s3 + $0x30] sm:$0xff]
    %v456 = vld [vmem:[%s3 + $0x38] sm:$0xff]
    %v457 = vld [vmem:[%s3 + $0x40] sm:$0xff]
    %v458 = vld [vmem:[%s3 + $0x48] sm:$0xff]
    %v459 = vld [vmem:[%s3 + $0x50] sm:$0xff]
    %v460 = vld [vmem:[%s3 + $0x58] sm:$0xff]
    %v461 = vld [vmem:[%s3 + $0x60] sm:$0xff]
    %v462 = vld [vmem:[%s3 + $0x68] sm:$0xff]
    %v463 = vld [vmem:[%s3 + $0x70] sm:$0xff]
    %v464 = vld [vmem:[%s3 + $0x78] sm:$0xff]
    %v465 = vld [vmem:[%s3 + $0x80] sm:$0xff]
    %v466 = vld [vmem:[%s3 + $0x88] sm:$0xff]
    %v467 = vld [vmem:[%s3 + $0x90] sm:$0xff]
    %v468 = vld [vmem:[%s3 + $0x98] sm:$0xff]
    %v469 = vld [vmem:[%s3 + $0xa0] sm:$0xff]
    %v470 = vld [vmem:[%s3 + $0xa8] sm:$0xff]
    %v471 = vld [vmem:[%s3 + $0xb0] sm:$0xff]
    %v472 = vld [vmem:[%s3 + $0xb8] sm:$0xff]
    %v473 = vld [vmem:[%s3 + $0xc0] sm:$0xff]
    %v474 = vld [vmem:[%s3 + $0xc8] sm:$0xff]
    %v475 = vld [vmem:[%s3 + $0xd0] sm:$0xff]
    %v476 = vld [vmem:[%s3 + $0xd8] sm:$0xff]
    %v477 = vld [vmem:[%s3 + $0xe0] sm:$0xff]
    %v478 = vld [vmem:[%s3 + $0xe8] sm:$0xff]
    %v479 = vld [vmem:[%s3 + $0xf0] sm:$0xff]
    %v480 = vld [vmem:[%s3 + $0xf8] sm:$0xff]
    %v481 = vld [vmem:[%s3 + $0x100] sm:$0xff]
    %v482 = vld [vmem:[%s3 + $0x108] sm:$0xff]
    %v483 = vld [vmem:[%s3 + $0x110] sm:$0xff]
    %v484 = vld [vmem:[%s3 + $0x118] sm:$0xff]
    %v485 = vld [vmem:[%s3 + $0x120] sm:$0xff]
    %v486 = vld [vmem:[%s3 + $0x128] sm:$0xff]
    %v487 = vld [vmem:[%s3 + $0x130] sm:$0xff]
    %v488 = vld [vmem:[%s3 + $0x138] sm:$0xff]
    %v489 = vld [vmem:[%s3 + $0x140] sm:$0xff]
    %v490 = vld [vmem:[%s3 + $0x148] sm:$0xff]
    %v491 = vld [vmem:[%s3 + $0x150] sm:$0xff]
    %v492 = vld [vmem:[%s3 + $0x158] sm:$0xff]
    %v493 = vld [vmem:[%s3 + $0x160] sm:$0xff]
    %v494 = vld [vmem:[%s3 + $0x168] sm:$0xff]
    %v495 = vld [vmem:[%s3 + $0x170] sm:$0xff]
    %v496 = vld [vmem:[%s3 + $0x178] sm:$0xff]
    %v497 = vld [vmem:[%s3 + $0x180] sm:$0xff]
    %v498 = vld [vmem:[%s3 + $0x188] sm:$0xff]
    %v499 = vld [vmem:[%s3 + $0x190] sm:$0xff]
    %v500 = vld [vmem:[%s3 + $0x198] sm:$0xff]
    %v501 = vld [vmem:[%s3 + $0x1a0] sm:$0xff]
    %v502 = vld [vmem:[%s3 + $0x1a8] sm:$0xff]
    %v503 = vld [vmem:[%s3 + $0x1b0] sm:$0xff]
    %v504 = vld [vmem:[%s3 + $0x1b8] sm:$0xff]
    %v505 = vld [vmem:[%s3 + $0x1c0] sm:$0xff]
    %v506 = vld [vmem:[%s3 + $0x1c8] sm:$0xff]
    %v507 = vld [vmem:[%s3 + $0x1d0] sm:$0xff]
    %v508 = vld [vmem:[%s3 + $0x1d8] sm:$0xff]
    %v509 = vld [vmem:[%s3 + $0x1e0] sm:$0xff]
    %v510 = vld [vmem:[%s3 + $0x1e8] sm:$0xff]
    %v511 = vld [vmem:[%s3 + $0x1f0] sm:$0xff]
    %v512 = vld [vmem:[%s3 + $0x1f8] sm:$0xff]
    %513 = vmatprep.subr.mxu0 0.0
    %514 = vmatpush1.msra.mxu0 %v464
    %515 = vmatprep.subr.mxu0 0.0
    %516 = vmatpush1.msra.mxu0 %v463
    %517 = vmatprep.subr.mxu0 0.0
    %518 = vmatpush1.msra.mxu0 %v462
    %519 = vmatprep.subr.mxu0 0.0
    %520 = vmatpush1.msra.mxu0 %v461
    %521 = vmatprep.subr.mxu0 0.0
    %522 = vmatpush1.msra.mxu0 %v460
    %523 = vmatprep.subr.mxu0 0.0
    %524 = vmatpush1.msra.mxu0 %v459
    %525 = vmatprep.subr.mxu0 0.0
    %526 = vmatpush1.msra.mxu0 %v458
    %527 = vmatprep.subr.mxu0 0.0
    %528 = vmatpush1.msra.mxu0 %v457
    %529 = vmatprep.subr.mxu0 0.0
    %530 = vmatpush1.msra.mxu0 %v456
    %531 = vmatprep.subr.mxu0 0.0
    %532 = vmatpush1.msra.mxu0 %v455
    %533 = vmatprep.subr.mxu0 0.0
    %534 = vmatpush1.msra.mxu0 %v454
    %535 = vmatprep.subr.mxu0 0.0
    %536 = vmatpush1.msra.mxu0 %v453
    %537 = vmatprep.subr.mxu0 0.0
    %538 = vmatpush1.msra.mxu0 %v452
    %539 = vmatprep.subr.mxu0 0.0
    %540 = vmatpush1.msra.mxu0 %v451
    %541 = vmatprep.subr.mxu0 0.0
    %542 = vmatpush1.msra.mxu0 %v450
    %543 = vmatprep.subr.mxu0 0.0
    %544 = vmatpush1.msra.mxu0 %v449
    %545 = vmatprep.subr.mxu0 0.0
    %546 = vmatpush2.msra.mxu0 %v480
    %547 = vmatprep.subr.mxu0 0.0
    %548 = vmatpush2.msra.mxu0 %v479
    %549 = vmatprep.subr.mxu0 0.0
    %550 = vmatpush2.msra.mxu0 %v478
    %551 = vmatprep.subr.mxu0 0.0
    %552 = vmatpush2.msra.mxu0 %v477
    %553 = vmatprep.subr.mxu0 0.0
    %554 = vmatpush2.msra.mxu0 %v476
    %555 = vmatprep.subr.mxu0 0.0
    %556 = vmatpush2.msra.mxu0 %v475
    %557 = vmatprep.subr.mxu0 0.0
    %558 = vmatpush2.msra.mxu0 %v474
    %559 = vmatprep.subr.mxu0 0.0
    %560 = vmatpush2.msra.mxu0 %v473
    %561 = vmatprep.subr.mxu0 0.0
    %562 = vmatpush2.msra.mxu0 %v472
    %563 = vmatprep.subr.mxu0 0.0
    %564 = vmatpush2.msra.mxu0 %v471
    %565 = vmatprep.subr.mxu0 0.0
    %566 = vmatpush2.msra.mxu0 %v470
    %567 = vmatprep.subr.mxu0 0.0
    %568 = vmatpush2.msra.mxu0 %v469
    %569 = vmatprep.subr.mxu0 0.0
    %570 = vmatpush2.msra.mxu0 %v468
    %571 = vmatprep.subr.mxu0 0.0
    %572 = vmatpush2.msra.mxu0 %v467
    %573 = vmatprep.subr.mxu0 0.0
    %574 = vmatpush2.msra.mxu0 %v466
    %575 = vmatprep.subr.mxu0 0.0
    %576 = vmatpush2.msra.mxu0 %v465
    %577 = vmatprep.mubr.f32.mxu0 %v356
    %578 = vmatmul.mubr.f32.gmra.mxu0 %v354
    %v579 = vpop.f32.mrf.mxu0
    %v580 = vadd.f32 0.0, %v579
    %v581 = vpop.f32.mrf.mxu0
    %582 = vmatprep.mubr.f32.mxu0 %v362
    %583 = vmatmul.mubr.f32.gmra.mxu0 %v360
    %v584 = vpop.f32.mrf.mxu0
    %v585 = vadd.f32 0.0, %v584
    %v586 = vpop.f32.mrf.mxu0
    %587 = vmatprep.mubr.f32.mxu0 %v442
    %588 = vmatmul.mubr.f32.gmra.mxu0 %v441
    %v589 = vpop.f32.mrf.mxu0
    %v590 = vadd.f32 0.0, %v589
    %v591 = vpop.f32.mrf.mxu0
    %592 = vmatprep.mubr.f32.mxu0 %v446
    %593 = vmatmul.mubr.f32.gmra.mxu0 %v445
    %v594 = vpop.f32.mrf.mxu0
    %v595 = vadd.f32 0.0, %v594
    %v596 = vpop.f32.mrf.mxu0
    %597 = vdwg.mxu0
    %598 = vmatprep.subr.mxu0 0.0
    %599 = vmatpush1.msra.mxu0 %v496
    %600 = vmatprep.subr.mxu0 0.0
    %601 = vmatpush1.msra.mxu0 %v495
    %602 = vmatprep.subr.mxu0 0.0
    %603 = vmatpush1.msra.mxu0 %v494
    %604 = vmatprep.subr.mxu0 0.0
    %605 = vmatpush1.msra.mxu0 %v493
    %606 = vmatprep.subr.mxu0 0.0
    %607 = vmatpush1.msra.mxu0 %v492
    %608 = vmatprep.subr.mxu0 0.0
    %609 = vmatpush1.msra.mxu0 %v491
    %610 = vmatprep.subr.mxu0 0.0
    %611 = vmatpush1.msra.mxu0 %v490
    %612 = vmatprep.subr.mxu0 0.0
    %613 = vmatpush1.msra.mxu0 %v489
    %614 = vmatprep.subr.mxu0 0.0
    %615 = vmatpush1.msra.mxu0 %v488
    %616 = vmatprep.subr.mxu0 0.0
    %617 = vmatpush1.msra.mxu0 %v487
    %618 = vmatprep.subr.mxu0 0.0
    %619 = vmatpush1.msra.mxu0 %v486
    %620 = vmatprep.subr.mxu0 0.0
    %621 = vmatpush1.msra.mxu0 %v485
    %622 = vmatprep.subr.mxu0 0.0
    %623 = vmatpush1.msra.mxu0 %v484
    %624 = vmatprep.subr.mxu0 0.0
    %625 = vmatpush1.msra.mxu0 %v483
    %626 = vmatprep.subr.mxu0 0.0
    %627 = vmatpush1.msra.mxu0 %v482
    %628 = vmatprep.subr.mxu0 0.0
    %629 = vmatpush1.msra.mxu0 %v481
    %630 = vmatprep.subr.mxu0 0.0
    %631 = vmatpush2.msra.mxu0 %v512
    %632 = vmatprep.subr.mxu0 0.0
    %633 = vmatpush2.msra.mxu0 %v511
    %634 = vmatprep.subr.mxu0 0.0
    %635 = vmatpush2.msra.mxu0 %v510
    %636 = vmatprep.subr.mxu0 0.0
    %637 = vmatpush2.msra.mxu0 %v509
    %638 = vmatprep.subr.mxu0 0.0
    %639 = vmatpush2.msra.mxu0 %v508
    %640 = vmatprep.subr.mxu0 0.0
    %641 = vmatpush2.msra.mxu0 %v507
    %642 = vmatprep.subr.mxu0 0.0
    %643 = vmatpush2.msra.mxu0 %v506
    %644 = vmatprep.subr.mxu0 0.0
    %645 = vmatpush2.msra.mxu0 %v505
    %646 = vmatprep.subr.mxu0 0.0
    %647 = vmatpush2.msra.mxu0 %v504
    %648 = vmatprep.subr.mxu0 0.0
    %649 = vmatpush2.msra.mxu0 %v503
    %650 = vmatprep.subr.mxu0 0.0
    %651 = vmatpush2.msra.mxu0 %v502
    %652 = vmatprep.subr.mxu0 0.0
    %653 = vmatpush2.msra.mxu0 %v501
    %654 = vmatprep.subr.mxu0 0.0
    %655 = vmatpush2.msra.mxu0 %v500
    %656 = vmatprep.subr.mxu0 0.0
    %657 = vmatpush2.msra.mxu0 %v499
    %658 = vmatprep.subr.mxu0 0.0
    %659 = vmatpush2.msra.mxu0 %v498
    %660 = vmatprep.subr.mxu0 0.0
    %661 = vmatpush2.msra.mxu0 %v497
    %662 = vmatprep.mubr.f32.mxu0 %v433
    %663 = vmatmul.mubr.f32.gmra.mxu0 %v431
    %v664 = vpop.f32.mrf.mxu0
    %v665 = vadd.f32 %v580, %v664
    %v666 = vpop.f32.mrf.mxu0
    %667 = vmatprep.mubr.f32.mxu0 %v439
    %668 = vmatmul.mubr.f32.gmra.mxu0 %v437
    %v669 = vpop.f32.mrf.mxu0
    %v670 = vadd.f32 %v585, %v669
    %v671 = vpop.f32.mrf.mxu0
    %672 = vmatprep.mubr.f32.mxu0 %v444
    %673 = vmatmul.mubr.f32.gmra.mxu0 %v443
    %v674 = vpop.f32.mrf.mxu0
    %v675 = vadd.f32 %v590, %v674
    %v676 = vpop.f32.mrf.mxu0
    %677 = vmatprep.mubr.f32.mxu0 %v448
    %678 = vmatmul.mubr.f32.gmra.mxu0 %v447
    %v679 = vpop.f32.mrf.mxu0
    %v680 = vadd.f32 %v595, %v679
    %v681 = vpop.f32.mrf.mxu0
    %682 = vdwg.mxu0
    %v683 = vmul.f32 %v665, 0.001953125
    %v684 = vmul.f32 %v670, 0.001953125
    %v685 = vmul.f32 %v675, 0.001953125
    %v686 = vmul.f32 %v680, 0.001953125
    %v687 = vmul.f32 %v683, %v683
    %v688 = vmul.f32 %v684, %v684
    %v689 = vsub.f32 %v685, %v687
    %v690 = vsub.f32 %v686, %v688
    %v691 = vadd.f32 %v689, 1e-05
    %v692 = vadd.f32 %v690, 1e-05
    %v693 = vrsqrt.pop %v691
    %v694 = vrsqrt.pop %v692
    %v695 = vld [vmem:[%s4] sm:$0xff]
    %v696 = vld [vmem:[%s4 + $0x8] sm:$0xff]
    %v697 = vmul.f32 %v695, %v693
    %v698 = vmul.f32 %v696, %v694
    %v699 = vld [vmem:[%s5] sm:$0xff]
    %v700 = vld [vmem:[%s5 + $0x8] sm:$0xff]
    %v701 = vmul.f32 %v683, %v697
    %v702 = vmul.f32 %v684, %v698
    %v703 = vsub.f32 %v699, %v701
    %v704 = vsub.f32 %v700, %v702
    %706 = vset.pattern.permute.xlu0 0
    %707 = vperm.xlu0 %706, %v697
    %v708 = vpop.permute.xlu0 %707
    %711 = vset.pattern.permute.xlu0 0
    %712 = vperm.xlu0 %711, %v698
    %v713 = vpop.permute.xlu0 %712
    %v715 = vmul.f32 %v354, %v708
    %v716 = vmul.f32 %v356, %v708
    %v717 = vmul.f32 %v431, %v708
    %v718 = vmul.f32 %v433, %v708
    %v719 = vmul.f32 %v360, %v713
    %v720 = vmul.f32 %v362, %v713
    %v721 = vmul.f32 %v437, %v713
    %v722 = vmul.f32 %v439, %v713
    %724 = vset.pattern.permute.xlu0 0
    %725 = vperm.xlu0 %724, %v703
    %v726 = vpop.permute.xlu0 %725
    %729 = vset.pattern.permute.xlu0 0
    %730 = vperm.xlu0 %729, %v704
    %v731 = vpop.permute.xlu0 %730
    %v733 = vadd.f32 %v715, %v726
    %v734 = vadd.f32 %v716, %v726
    %v735 = vadd.f32 %v717, %v726
    %v736 = vadd.f32 %v718, %v726
    %v737 = vadd.f32 %v719, %v731
    %v738 = vadd.f32 %v720, %v731
    %v739 = vadd.f32 %v721, %v731
    %v740 = vadd.f32 %v722, %v731
    %v741 = vmul.f32 %v733, 0.5
    %v742 = vmul.f32 %v734, 0.5
    %v743 = vmul.f32 %v735, 0.5
    %v744 = vmul.f32 %v736, 0.5
    %v745 = vmul.f32 %v737, 0.5
    %v746 = vmul.f32 %v738, 0.5
    %v747 = vmul.f32 %v739, 0.5
    %v748 = vmul.f32 %v740, 0.5
    %v749 = vmul.f32 %v733, 0.044715
    %v750 = vmul.f32 %v734, 0.044715
    %v751 = vmul.f32 %v735, 0.044715
    %v752 = vmul.f32 %v736, 0.044715
    %v753 = vmul.f32 %v737, 0.044715
    %v754 = vmul.f32 %v738, 0.044715
    %v755 = vmul.f32 %v739, 0.044715
    %v756 = vmul.f32 %v740, 0.044715
    %v757 = vmul.f32 %v749, %v733
    %v758 = vmul.f32 %v750, %v734
    %v759 = vmul.f32 %v751, %v735
    %v760 = vmul.f32 %v752, %v736
    %v761 = vmul.f32 %v753, %v737
    %v762 = vmul.f32 %v754, %v738
    %v763 = vmul.f32 %v755, %v739
    %v764 = vmul.f32 %v756, %v740
    %v765 = vmul.f32 %v757, %v733
    %v766 = vmul.f32 %v758, %v734
    %v767 = vmul.f32 %v759, %v735
    %v768 = vmul.f32 %v760, %v736
    %v769 = vmul.f32 %v761, %v737
    %v770 = vmul.f32 %v762, %v738
    %v771 = vmul.f32 %v763, %v739
    %v772 = vmul.f32 %v764, %v740
    %v773 = vadd.f32 %v733, %v765
    %v774 = vadd.f32 %v734, %v766
    %v775 = vadd.f32 %v735, %v767
    %v776 = vadd.f32 %v736, %v768
    %v777 = vadd.f32 %v737, %v769
    %v778 = vadd.f32 %v738, %v770
    %v779 = vadd.f32 %v739, %v771
    %v780 = vadd.f32 %v740, %v772
    %v781 = vmul.f32 %v773, 0.7978846
    %v782 = vmul.f32 %v774, 0.7978846
    %v783 = vmul.f32 %v775, 0.7978846
    %v784 = vmul.f32 %v776, 0.7978846
    %v785 = vmul.f32 %v777, 0.7978846
    %v786 = vmul.f32 %v778, 0.7978846
    %v787 = vmul.f32 %v779, 0.7978846
    %v788 = vmul.f32 %v780, 0.7978846
    %v789 = vtanh.pop %v781
    %v790 = vtanh.pop %v782
    %v791 = vtanh.pop %v783
    %v792 = vtanh.pop %v784
    %v793 = vtanh.pop %v785
    %v794 = vtanh.pop %v786
    %v795 = vtanh.pop %v787
    %v796 = vtanh.pop %v788
    %v797 = vadd.f32 %v789, 1.0
    %v798 = vadd.f32 %v790, 1.0
    %v799 = vadd.f32 %v791, 1.0
    %v800 = vadd.f32 %v792, 1.0
    %v801 = vadd.f32 %v793, 1.0
    %v802 = vadd.f32 %v794, 1.0
    %v803 = vadd.f32 %v795, 1.0
    %v804 = vadd.f32 %v796, 1.0
    %v805 = vmul.f32 %v741, %v797
    %v806 = vmul.f32 %v742, %v798
    %v807 = vmul.f32 %v743, %v799
    %v808 = vmul.f32 %v744, %v800
    %v809 = vmul.f32 %v745, %v801
    %v810 = vmul.f32 %v746, %v802
    %v811 = vmul.f32 %v747, %v803
    %v812 = vmul.f32 %v748, %v804
    %813 = vst [vmem:[#allocation3] sm:$0xff] %v805
    %814 = vst [vmem:[#allocation3 + $0x8] sm:$0xff] %v806
    %815 = vst [vmem:[#allocation3 + $0x10] sm:$0xff] %v807
    %816 = vst [vmem:[#allocation3 + $0x18] sm:$0xff] %v808
    %817 = vst [vmem:[#allocation3 + $0x20] sm:$0xff] %v809
    %818 = vst [vmem:[#allocation3 + $0x28] sm:$0xff] %v810
    %819 = vst [vmem:[#allocation3 + $0x30] sm:$0xff] %v811
    %820 = vst [vmem:[#allocation3 + $0x38] sm:$0xff] %v812
    // Predicated region
    $region26: #{tpu_custom_call.1} parent=1 // pred_check
      _
    $region27: #{tpu_custom_call.1} parent=1 // pred_check_branch
      %822 = sbr.rel (0) target = $region29
    $region28: #{tpu_custom_call.1} parent=1 // pred_region
      %s824 = ssub.s32 1024, 1024
      %825 = vsyncadd [#allocation4], %s824
      %s826 = sshll.u32 [#allocation3], 4
      %s827 = int_to_ptr.vmem [resolvable:$true] %s826
      %832 = dma.vmem_to_hbm [thread:$0]  %s827, 1024, %s6, [#allocation4], 512, 512, 32
    $region29: #{tpu_custom_call.1} parent=1 // pred_fallthru
      _
    // Predicated region
    $region30: #{tpu_custom_call.1} parent=1 // pred_check
      _
    $region31: #{tpu_custom_call.1} parent=1 // pred_check_branch
      %834 = sbr.rel (0) target = $region33
    $region32: #{tpu_custom_call.1} parent=1 // pred_region
      %835 = dma.done [#allocation4], 1024
    $region33: #{tpu_custom_call.1} parent=1 // pred_fallthru
      _
    %836 = vsyncpa [#allocation4], 1

</llo_original>
